<compile_context>
chip_gen: v5e
topology: v5e:2x2
jax: 0.10.0
libtpu: 0.0.40
codegen_flags: <defaults>
</compile_context>

<pallas_src>
import functools

import jax
import jax.numpy as jnp
from jax.experimental import pallas as pl
from jax.experimental.pallas import tpu as pltpu

_LANE = 128   # vreg lane width
_SUB = 8      # vreg sublane count


def _round_up(n: int, m: int) -> int:
    return ((n + m - 1) // m) * m


def encoder_kernel(x_ref, w1_ref, b1_ref, w2_ref, b2_ref, o_ref, *, negative_slope):
    # Layer 1: x @ W1 + b1 on the MXU with f32 accumulation.
    h = jnp.dot(x_ref[...], w1_ref[...], preferred_element_type=jnp.float32)
    h = h + b1_ref[...]                       # (1, hidden_p) broadcasts over batch tile
    # LeakyReLU in f32 (post-accumulation) — single VPU compare/select pass.
    h = jnp.where(h >= 0, h, negative_slope * h)
    # Layer 2: h @ W2 + b2. Lane-dense (latent padded to 128) output store.
    y = jnp.dot(h.astype(w2_ref.dtype), w2_ref[...],
                preferred_element_type=jnp.float32)
    o_ref[...] = (y + b2_ref[...]).astype(o_ref.dtype)


def encoder_forward(x, w1, b1, w2, b2, negative_slope=0.2, block_batch=512):
    """x: (B, in_features); w1: (in_features, 2*latent); w2: (2*latent, latent)."""
    B, F = x.shape
    Fw, hidden = w1.shape
    hidden2, latent = w2.shape
    assert Fw == F and hidden2 == hidden

    dtype = x.dtype
    itemsize = jnp.dtype(dtype).itemsize

    # Pad the (small, resident) weight dims up to the 128-lane width so both
    # matmuls and the output writeback are unmasked / lane-dense.
    hidden_p = _round_up(hidden, _LANE)
    latent_p = _round_up(latent, _LANE)

    # Batch tile: large (amortizes ~0.35us per-step overhead), multiple of 8
    # sublanes, never bigger than the (padded) batch itself.
    TB = min(block_batch, _round_up(B, _SUB))
    TB = _round_up(TB, _SUB)
    B_p = _round_up(B, TB)

    # Zero-pad params once; padded hidden columns give h == 0 after LeakyReLU
    # and padded W2 rows/cols contribute exactly 0, so results are unchanged.
    w1_p = jnp.zeros((F, hidden_p), dtype).at[:, :hidden].set(w1.astype(dtype))
    b1_p = jnp.zeros((1, hidden_p), dtype).at[:, :hidden].set(b1.astype(dtype))
    w2_p = jnp.zeros((hidden_p, latent_p), dtype).at[:hidden, :latent].set(w2.astype(dtype))
    b2_p = jnp.zeros((1, latent_p), dtype).at[:, :latent].set(b2.astype(dtype))

    x_p = x if B_p == B else jnp.zeros((B_p, F), dtype).at[:B, :].set(x)

    grid = (pl.cdiv(B_p, TB),)

    # VMEM budget: double-buffered x / out tiles + resident padded params.
    tile_bytes = 2 * (TB * F + TB * latent_p) * itemsize
    param_bytes = (F * hidden_p + hidden_p * latent_p + hidden_p + latent_p) * itemsize
    vmem_bytes = tile_bytes + param_bytes + (2 << 20)        # + headroom
    vmem_bytes = int(min(max(vmem_bytes, 32 << 20), 60 << 20))  # >= v5e default, < v7x 64 MiB

    kernel = functools.partial(encoder_kernel, negative_slope=negative_slope)

    out_p = pl.pallas_call(
        kernel,
        out_shape=jax.ShapeDtypeStruct((B_p, latent_p), dtype),
        grid_spec=pl.GridSpec(
            grid=grid,
            in_specs=[
                pl.BlockSpec((TB, F), lambda i: (i, 0)),          # x: batch-tiled
                pl.BlockSpec((F, hidden_p), lambda i: (0, 0)),    # W1: resident
                pl.BlockSpec((1, hidden_p), lambda i: (0, 0)),    # b1: resident
                pl.BlockSpec((hidden_p, latent_p), lambda i: (0, 0)),  # W2: resident
                pl.BlockSpec((1, latent_p), lambda i: (0, 0)),    # b2: resident
            ],
            out_specs=pl.BlockSpec((TB, latent_p), lambda i: (i, 0)),
        ),
        compiler_params=pltpu.CompilerParams(
            dimension_semantics=("parallel",),   # sharded across both TCs on v7x
            vmem_limit_bytes=vmem_bytes,
        ),
    )(x_p, w1_p, b1_p, w2_p, b2_p)

    # Strip batch / lane padding.
    return out_p[:B, :latent]


def init_params(key, in_features, latent_dim, dtype=jnp.float32):
    hidden = latent_dim * 2
    k1, k2, k3, k4 = jax.random.split(key, 4)
    # Mimic PyTorch's uniform(-1/sqrt(fan_in), 1/sqrt(fan_in)) init.
    bound1 = 1.0 / jnp.sqrt(in_features)
    bound2 = 1.0 / jnp.sqrt(hidden)
    w1 = jax.random.uniform(k1, (in_features, hidden), dtype, -bound1, bound1)
    b1 = jax.random.uniform(k2, (hidden,), dtype, -bound1, bound1)
    w2 = jax.random.uniform(k3, (hidden, latent_dim), dtype, -bound2, bound2)
    b2 = jax.random.uniform(k4, (latent_dim,), dtype, -bound2, bound2)
    return w1, b1, w2, b2


if __name__ == "__main__":
    key = jax.random.PRNGKey(0)
    kx, kp = jax.random.split(key)

    batch = 12            # deliberately not a multiple of 8: exercises batch padding
    in_features = 32
    latent_dim = 16
    negative_slope = 0.2

    x = jax.random.normal(kx, (batch, in_features), jnp.float32)
    w1, b1, w2, b2 = init_params(kp, in_features, latent_dim)

    out = encoder_forward(x, w1, b1, w2, b2, negative_slope)
    out = jax.block_until_ready(out)

    # Pure-JAX reference check
    h_ref = x @ w1 + b1
    h_ref = jnp.where(h_ref >= 0, h_ref, negative_slope * h_ref)
    y_ref = h_ref @ w2 + b2
    assert out.shape == (batch, latent_dim)
    assert jnp.allclose(out, y_ref, atol=1e-5, rtol=1e-5)

    print("KERNEL_OK")
</pallas_src>

<mosaic_0001>
module attributes {stable_mosaic.version = 11 : i64} {
  func.func @encoder_kernel(%arg0: i32, %arg1: memref<16x32xf32, #tpu.memory_space<vmem>>, %arg2: memref<32x128xf32, #tpu.memory_space<vmem>>, %arg3: memref<1x128xf32, #tpu.memory_space<vmem>>, %arg4: memref<128x128xf32, #tpu.memory_space<vmem>>, %arg5: memref<1x128xf32, #tpu.memory_space<vmem>>, %arg6: memref<16x128xf32, #tpu.memory_space<vmem>>) attributes {dimension_semantics = [#tpu.dimension_semantics<parallel>], iteration_bounds = array<i64: 1>, scalar_prefetch = 0 : i64, scratch_operands = 0 : i64, tpu.core_type = #tpu.core_type<tc>, window_params = [{transform_indices = @transform_0, window_bounds = array<i64: 16, 32>}, {pipeline_mode = #tpu.pipeline_mode<synchronous>, transform_indices = @transform_1, window_bounds = array<i64: 32, 128>}, {pipeline_mode = #tpu.pipeline_mode<synchronous>, transform_indices = @transform_2, window_bounds = array<i64: 1, 128>}, {pipeline_mode = #tpu.pipeline_mode<synchronous>, transform_indices = @transform_3, window_bounds = array<i64: 128, 128>}, {pipeline_mode = #tpu.pipeline_mode<synchronous>, transform_indices = @transform_4, window_bounds = array<i64: 1, 128>}, {transform_indices = @transform_5, window_bounds = array<i64: 16, 128>}]} {
    %c0 = arith.constant 0 : index
    %c0_0 = arith.constant 0 : index
    %0 = vector.load %arg1[%c0, %c0_0] : memref<16x32xf32, #tpu.memory_space<vmem>>, vector<16x32xf32>
    %c0_1 = arith.constant 0 : index
    %c0_2 = arith.constant 0 : index
    %1 = vector.load %arg2[%c0_1, %c0_2] : memref<32x128xf32, #tpu.memory_space<vmem>>, vector<32x128xf32>
    %cst = arith.constant dense<0.000000e+00> : vector<16x128xf32>
    %2 = tpu.matmul %0, %1, %cst {dimension_numbers = #tpu.dot_dimension_numbers<[1], [0], [0], [1], [0, 0, 1, 1], [], []>} : vector<16x32xf32>, vector<32x128xf32>, vector<16x128xf32> -> vector<16x128xf32>
    %c0_3 = arith.constant 0 : index
    %c0_4 = arith.constant 0 : index
    %3 = vector.load %arg3[%c0_3, %c0_4] : memref<1x128xf32, #tpu.memory_space<vmem>>, vector<1x128xf32>
    %4 = vector.broadcast %3 : vector<1x128xf32> to vector<16x128xf32>
    %5 = arith.addf %2, %4 : vector<16x128xf32>
    %cst_5 = arith.constant 0.000000e+00 : f32
    %6 = vector.broadcast %cst_5 : f32 to vector<16x128xf32>
    %7 = arith.cmpf oge, %5, %6 : vector<16x128xf32>
    %cst_6 = arith.constant 2.000000e-01 : f32
    %8 = vector.broadcast %cst_6 : f32 to vector<16x128xf32>
    %9 = arith.mulf %8, %5 : vector<16x128xf32>
    %10 = arith.select %7, %5, %9 : vector<16x128xi1>, vector<16x128xf32>
    %c0_7 = arith.constant 0 : index
    %c0_8 = arith.constant 0 : index
    %11 = vector.load %arg4[%c0_7, %c0_8] : memref<128x128xf32, #tpu.memory_space<vmem>>, vector<128x128xf32>
    %cst_9 = arith.constant dense<0.000000e+00> : vector<16x128xf32>
    %12 = tpu.matmul %10, %11, %cst_9 {dimension_numbers = #tpu.dot_dimension_numbers<[1], [0], [0], [1], [0, 0, 1, 1], [], []>} : vector<16x128xf32>, vector<128x128xf32>, vector<16x128xf32> -> vector<16x128xf32>
    %c0_10 = arith.constant 0 : index
    %c0_11 = arith.constant 0 : index
    %13 = vector.load %arg5[%c0_10, %c0_11] : memref<1x128xf32, #tpu.memory_space<vmem>>, vector<1x128xf32>
    %14 = vector.broadcast %13 : vector<1x128xf32> to vector<16x128xf32>
    %15 = arith.addf %12, %14 : vector<16x128xf32>
    %c0_12 = arith.constant 0 : index
    %c0_13 = arith.constant 0 : index
    %16 = vector.load %arg6[%c0_12, %c0_13] : memref<16x128xf32, #tpu.memory_space<vmem>>, vector<16x128xf32>
    tpu.vector_store %arg6[%c0_12, %c0_13], %15 {strides = array<i32>} : memref<16x128xf32, #tpu.memory_space<vmem>>, vector<16x128xf32>,
    return
  }
  func.func @transform_0(%arg0: i32) -> (i32, i32) {
    %c0_i32 = arith.constant 0 : i32
    %c0_i32_0 = arith.constant 0 : i32
    return %arg0, %c0_i32 : i32, i32
  }
  func.func @transform_1(%arg0: i32) -> (i32, i32) {
    %c0_i32 = arith.constant 0 : i32
    %c0_i32_0 = arith.constant 0 : i32
    %c0_i32_1 = arith.constant 0 : i32
    return %c0_i32, %c0_i32_0 : i32, i32
  }
  func.func @transform_2(%arg0: i32) -> (i32, i32) {
    %c0_i32 = arith.constant 0 : i32
    %c0_i32_0 = arith.constant 0 : i32
    %c0_i32_1 = arith.constant 0 : i32
    return %c0_i32, %c0_i32_0 : i32, i32
  }
  func.func @transform_3(%arg0: i32) -> (i32, i32) {
    %c0_i32 = arith.constant 0 : i32
    %c0_i32_0 = arith.constant 0 : i32
    %c0_i32_1 = arith.constant 0 : i32
    return %c0_i32, %c0_i32_0 : i32, i32
  }
  func.func @transform_4(%arg0: i32) -> (i32, i32) {
    %c0_i32 = arith.constant 0 : i32
    %c0_i32_0 = arith.constant 0 : i32
    %c0_i32_1 = arith.constant 0 : i32
    return %c0_i32, %c0_i32_0 : i32, i32
  }
  func.func @transform_5(%arg0: i32) -> (i32, i32) {
    %c0_i32 = arith.constant 0 : i32
    %c0_i32_0 = arith.constant 0 : i32
    return %arg0, %c0_i32 : i32, i32
  }
}

</mosaic_0001>

<llo_original>
// kernel: tpu_custom_call.1
$region0: #{tpu_custom_call.1}
  #allocation0 [shape = 'u32[]', space=smem, size = 0x4, offset = 0x4, fixed_abs, tag = 'smem constant byte address 0x4 - core index']
  #allocation1 [shape = 'u32[72,128]{1,0:T(1,128)}', space=vmem, size = 0x9000, scoped, tag = 'internal scratch']
  %s0 = inlined_call_operand.hbm [shape: f32[16,32], index: 0, kind: input, shape index: {}]
  %s1 = inlined_call_operand.hbm [shape: f32[32,128], index: 1, kind: input, shape index: {}]
  %s2 = inlined_call_operand.vmem [shape: f32[1,128], index: 2, kind: input, shape index: {}]
  %s3 = inlined_call_operand.hbm [shape: f32[128,128], index: 3, kind: input, shape index: {}]
  %s4 = inlined_call_operand.vmem [shape: f32[1,128], index: 4, kind: input, shape index: {}]
  %s5 = inlined_call_operand.hbm [shape: f32[16,128], index: 5, kind: output, shape index: {}]
  %s6 = sld [smem:[#allocation0]]
  $region42: #{tpu_custom_call.1} parent=0
    _
  %s8 = ssub.s32 1, %s6
  %s9 = scalar_select 0, %s8, %s6
  $region1: #{tpu_custom_call.1} parent=0
    #allocation2 [shape = 'u8[8192]{0}', space=vmem, size = 0x2000, scoped, tag = 'input window, operand 0, single buffered']
    #allocation3 [shape = 's32[1]{0}', space=sflag, size = 0x4, scoped, tag = 'scoped memory for tpu_custom_call.1']
    #allocation4 [shape = 's32[1]{0}', space=sflag, size = 0x4, scoped, tag = 'scoped memory for tpu_custom_call.1']
    #allocation5 [shape = 'u8[16384]{0}', space=vmem, size = 0x4000, scoped, tag = 'input window, operand 1, single buffered']
    #allocation6 [shape = 's32[1]{0}', space=sflag, size = 0x4, scoped, tag = 'scoped memory for tpu_custom_call.1']
    #allocation7 [shape = 'u8[65536]{0}', space=vmem, size = 0x10000, scoped, tag = 'input window, operand 3, single buffered']
    #allocation8 [shape = 'u8[8192]{0}', space=vmem, size = 0x2000, scoped, tag = 'output window, operand 0, single buffered']
    %10 = vsyncpa [#allocation3], 0
    %11 = vsyncpa [#allocation6], 0
    %12 = vsyncpa [#allocation4], 0
    // Predicated region
    $region2: #{tpu_custom_call.1} parent=1 // pred_check
      _
    $region3: #{tpu_custom_call.1} parent=1 // pred_check_branch
      %14 = sbr.rel (0) target = $region5
    $region4: #{tpu_custom_call.1} parent=1 // pred_region
      %16 = vsyncadd [#allocation3], 0
      %s17 = sshll.u32 %s0, 4
      %s18 = int_to_ptr.hbm [resolvable:$true] %s17
      %s19 = sshll.u32 [#allocation2], 4
      %s20 = int_to_ptr.vmem [resolvable:$true] %s19
      %25 = dma.hbm_to_vmem [thread:$0]  %s18, 256, %s20, [#allocation3], 128, 128, 8
    $region5: #{tpu_custom_call.1} parent=1 // pred_fallthru
      _
    // Predicated region
    $region6: #{tpu_custom_call.1} parent=1 // pred_check
      _
    $region7: #{tpu_custom_call.1} parent=1 // pred_check_branch
      %27 = sbr.rel (0) target = $region9
    $region8: #{tpu_custom_call.1} parent=1 // pred_region
      %29 = vsyncadd [#allocation6], 0
      %s30 = sshll.u32 %s1, 4
      %s31 = int_to_ptr.hbm [resolvable:$true] %s30
      %s32 = sshll.u32 [#allocation5], 4
      %s33 = int_to_ptr.vmem [resolvable:$true] %s32
      %38 = dma.hbm_to_vmem [thread:$0]  %s31, 512, %s33, [#allocation6], 128, 128, 8
    $region9: #{tpu_custom_call.1} parent=1 // pred_fallthru
      _
    // Predicated region
    $region10: #{tpu_custom_call.1} parent=1 // pred_check
      _
    $region11: #{tpu_custom_call.1} parent=1 // pred_check_branch
      %40 = sbr.rel (0) target = $region13
    $region12: #{tpu_custom_call.1} parent=1 // pred_region
      _
    $region13: #{tpu_custom_call.1} parent=1 // pred_fallthru
      _
    // Predicated region
    $region14: #{tpu_custom_call.1} parent=1 // pred_check
      _
    $region15: #{tpu_custom_call.1} parent=1 // pred_check_branch
      %42 = sbr.rel (0) target = $region17
    $region16: #{tpu_custom_call.1} parent=1 // pred_region
      %44 = vsyncadd [#allocation6], 0
      %s45 = sshll.u32 %s3, 4
      %s46 = int_to_ptr.hbm [resolvable:$true] %s45
      %s47 = sshll.u32 [#allocation7], 4
      %s48 = int_to_ptr.vmem [resolvable:$true] %s47
      %53 = dma.hbm_to_vmem [thread:$0]  %s46, 2048, %s48, [#allocation6], 128, 128, 8
    $region17: #{tpu_custom_call.1} parent=1 // pred_fallthru
      _
    // Predicated region
    $region18: #{tpu_custom_call.1} parent=1 // pred_check
      _
    $region19: #{tpu_custom_call.1} parent=1 // pred_check_branch
      %55 = sbr.rel (0) target = $region21
    $region20: #{tpu_custom_call.1} parent=1 // pred_region
      _
    $region21: #{tpu_custom_call.1} parent=1 // pred_fallthru
      _
    // Predicated region
    $region22: #{tpu_custom_call.1} parent=1 // pred_check
      _
    $region23: #{tpu_custom_call.1} parent=1 // pred_check_branch
      %57 = sbr.rel (0) target = $region25
    $region24: #{tpu_custom_call.1} parent=1 // pred_region
      %59 = dma.done [#allocation3], 256
    $region25: #{tpu_custom_call.1} parent=1 // pred_fallthru
      _
    // Predicated region
    $region26: #{tpu_custom_call.1} parent=1 // pred_check
      _
    $region27: #{tpu_custom_call.1} parent=1 // pred_check_branch
      %61 = sbr.rel (0) target = $region29
    $region28: #{tpu_custom_call.1} parent=1 // pred_region
      %63 = dma.done [#allocation6], 512
    $region29: #{tpu_custom_call.1} parent=1 // pred_fallthru
      _
    // Predicated region
    $region30: #{tpu_custom_call.1} parent=1 // pred_check
      _
    $region31: #{tpu_custom_call.1} parent=1 // pred_check_branch
      %65 = sbr.rel (0) target = $region33
    $region32: #{tpu_custom_call.1} parent=1 // pred_region
      %67 = dma.done [#allocation6], 2048
    $region33: #{tpu_custom_call.1} parent=1 // pred_fallthru
      _
    %v68 = vld [vmem:[#allocation2] sm:$0xff]
    %v69 = vld [vmem:[#allocation2 + $0x8] sm:$0xff]
    %v70 = vld [vmem:[#allocation5] sm:$0xff]
    %v71 = vld [vmem:[#allocation5 + $0x8] sm:$0xff]
    %v72 = vld [vmem:[#allocation5 + $0x10] sm:$0xff]
    %v73 = vld [vmem:[#allocation5 + $0x18] sm:$0xff]
    %v74 = vld [vmem:[%s2] sm:$0x1]
    %v76 = vperm.slane %v74, 0
    %vm78 = vcmask 261120
    %v80 = vsel %vm78, %v68, 0
    %v83 = vsel %vm78, %v69, 0
    %85 = vmatpush.msra.mxu0 0.0
    %86 = vmatpush.msra.mxu0 0.0
    %87 = vmatpush.msra.mxu0 0.0
    %88 = vmatpush.msra.mxu0 0.0
    %89 = vmatpush.msra.mxu0 0.0
    %90 = vmatpush.msra.mxu0 0.0
    %91 = vmatpush.msra.mxu0 0.0
    %92 = vmatpush.msra.mxu0 0.0
    %93 = vmatpush.msra.mxu0 0.0
    %94 = vmatpush.msra.mxu0 0.0
    %95 = vmatpush.msra.mxu0 0.0
    %96 = vmatpush.msra.mxu0 0.0
    %97 = vmatpush.msra.mxu0 %v73
    %98 = vmatpush.msra.mxu0 %v72
    %99 = vmatpush.msra.mxu0 %v71
    %100 = vmatpush.msra.mxu0 %v70
    %101 = vmatmul.f32.gmra.mxu0 %v80
    %v102 = vpop.f32.mrf.mxu0
    %v103 = vadd.f32 %v76, %v102
    %104 = vmatmul.f32.gmra.mxu0 %v83
    %v105 = vpop.f32.mrf.mxu0
    %v106 = vadd.f32 %v76, %v105
    %107 = vdwg.mxu0
    %vm108 = vcmp.ge.f32.partialorder %v103, 0.0
    %vm109 = vcmp.ge.f32.partialorder %v106, 0.0
    %v110 = vmul.f32 %v103, 0.2
    %v111 = vmul.f32 %v106, 0.2
    %v112 = vsel %vm108, %v103, %v110
    %v113 = vsel %vm109, %v106, %v111
    %v114 = vld [vmem:[#allocation7] sm:$0xff]
    %v115 = vld [vmem:[#allocation7 + $0x8] sm:$0xff]
    %v116 = vld [vmem:[#allocation7 + $0x10] sm:$0xff]
    %v117 = vld [vmem:[#allocation7 + $0x18] sm:$0xff]
    %v118 = vld [vmem:[#allocation7 + $0x20] sm:$0xff]
    %v119 = vld [vmem:[#allocation7 + $0x28] sm:$0xff]
    %v120 = vld [vmem:[#allocation7 + $0x30] sm:$0xff]
    %v121 = vld [vmem:[#allocation7 + $0x38] sm:$0xff]
    %v122 = vld [vmem:[#allocation7 + $0x40] sm:$0xff]
    %v123 = vld [vmem:[#allocation7 + $0x48] sm:$0xff]
    %v124 = vld [vmem:[#allocation7 + $0x50] sm:$0xff]
    %v125 = vld [vmem:[#allocation7 + $0x58] sm:$0xff]
    %v126 = vld [vmem:[#allocation7 + $0x60] sm:$0xff]
    %v127 = vld [vmem:[#allocation7 + $0x68] sm:$0xff]
    %v128 = vld [vmem:[#allocation7 + $0x70] sm:$0xff]
    %v129 = vld [vmem:[#allocation7 + $0x78] sm:$0xff]
    %v130 = vld [vmem:[%s4] sm:$0x1]
    %v132 = vperm.slane %v130, 0
    %134 = vmatpush.msra.mxu0 %v129
    %135 = vmatpush.msra.mxu0 %v128
    %136 = vmatpush.msra.mxu0 %v127
    %137 = vmatpush.msra.mxu0 %v126
    %138 = vmatpush.msra.mxu0 %v125
    %139 = vmatpush.msra.mxu0 %v124
    %140 = vmatpush.msra.mxu0 %v123
    %141 = vmatpush.msra.mxu0 %v122
    %142 = vmatpush.msra.mxu0 %v121
    %143 = vmatpush.msra.mxu0 %v120
    %144 = vmatpush.msra.mxu0 %v119
    %145 = vmatpush.msra.mxu0 %v118
    %146 = vmatpush.msra.mxu0 %v117
    %147 = vmatpush.msra.mxu0 %v116
    %148 = vmatpush.msra.mxu0 %v115
    %149 = vmatpush.msra.mxu0 %v114
    %150 = vmatmul.f32.gmra.mxu0 %v112
    %v151 = vpop.f32.mrf.mxu0
    %v152 = vadd.f32 %v132, %v151
    %153 = vmatmul.f32.gmra.mxu0 %v113
    %v154 = vpop.f32.mrf.mxu0
    %v155 = vadd.f32 %v132, %v154
    %156 = vdwg.mxu0
    %157 = vst [vmem:[#allocation8] sm:$0xff] %v152
    %158 = vst [vmem:[#allocation8 + $0x8] sm:$0xff] %v155
    // Predicated region
    $region34: #{tpu_custom_call.1} parent=1 // pred_check
      _
    $region35: #{tpu_custom_call.1} parent=1 // pred_check_branch
      %160 = sbr.rel (0) target = $region37
    $region36: #{tpu_custom_call.1} parent=1 // pred_region
      %162 = vsyncadd [#allocation4], 0
      %s163 = sshll.u32 [#allocation8], 4
      %s164 = int_to_ptr.vmem [resolvable:$true] %s163
      %s165 = sshll.u32 %s5, 4
      %s166 = int_to_ptr.hbm [resolvable:$true] %s165
      %171 = dma.vmem_to_hbm [thread:$0]  %s164, 256, %s166, [#allocation4], 128, 128, 8
    $region37: #{tpu_custom_call.1} parent=1 // pred_fallthru
      _
    // Predicated region
    $region38: #{tpu_custom_call.1} parent=1 // pred_check
      _
    $region39: #{tpu_custom_call.1} parent=1 // pred_check_branch
      %173 = sbr.rel (0) target = $region41
    $region40: #{tpu_custom_call.1} parent=1 // pred_region
      %175 = dma.done [#allocation4], 256
    $region41: #{tpu_custom_call.1} parent=1 // pred_fallthru
      _
    %176 = vsyncpa [#allocation3], 1
    %177 = vsyncpa [#allocation6], 1
    %178 = vsyncpa [#allocation4], 1

</llo_original>
